<compile_context>
chip_gen: v5e
topology: v5e:2x2
jax: 0.10.0
libtpu: 0.0.40
codegen_flags: <defaults>
</compile_context>

<pallas_src>
import functools

import jax
import jax.numpy as jnp
from jax.experimental import pallas as pl
from jax.experimental.pallas import tpu as pltpu


# --------------------------------------------------------------------------- #
# Kernels
# --------------------------------------------------------------------------- #
def _decoder_kernel_single_k(x_ref, w_ref, b_ref, o_ref):
    """Whole hidden dim in one K block: no accumulator, direct fused epilogue."""
    y = jax.lax.dot_general(
        x_ref[...], w_ref[...],
        dimension_numbers=(((1,), (1,)), ((), ())),   # x[., H] . w[., H]^T
        preferred_element_type=jnp.float32)
    o_ref[...] = jax.nn.sigmoid(y + b_ref[...]).astype(o_ref.dtype)


def _decoder_kernel_multi_k(x_ref, w_ref, b_ref, o_ref, acc_ref, *,
                            h_total, mask_k_tail):
    """K-tiled path: f32 VMEM accumulator, last K step fused into the epilogue."""
    k = pl.program_id(2)
    n_k = pl.num_programs(2)
    tk = x_ref.shape[1]

    xv = x_ref[...]
    wv = w_ref[...]
    if mask_k_tail:
        # H does not divide tk: zero the out-of-bounds tail columns of BOTH
        # operands so padding garbage (possibly NaN bits) never reaches the MXU.
        col = jax.lax.broadcasted_iota(jnp.int32, (1, tk), 1) + k * tk
        valid = col < h_total
        xv = jnp.where(valid, xv, 0).astype(xv.dtype)
        wv = jnp.where(valid, wv, 0).astype(wv.dtype)

    partial = jax.lax.dot_general(
        xv, wv,
        dimension_numbers=(((1,), (1,)), ((), ())),
        preferred_element_type=jnp.float32)

    @pl.when(k == 0)
    def _init():
        acc_ref[...] = partial

    @pl.when((k > 0) & (k < n_k - 1))
    def _accumulate():
        acc_ref[...] += partial

    @pl.when(k == n_k - 1)                 # fused: no acc store/reload here
    def _finalize():
        y = acc_ref[...] + partial + b_ref[...]
        o_ref[...] = jax.nn.sigmoid(y).astype(o_ref.dtype)


# --------------------------------------------------------------------------- #
# Wrapper
# --------------------------------------------------------------------------- #
def _round_up(x, m):
    return -(-x // m) * m


def _pick_tile(dim, target, align):
    """Balanced tile <= target, multiple of `align` (or the full dim)."""
    if dim <= target:
        return dim
    n_tiles = -(-dim // target)
    t = _round_up(-(-dim // n_tiles), align)
    return min(t, target)


def task2_decoder(x, weight, bias, *, tm=512, tn=1024, tk=1024,
                  compute_dtype=None, out_dtype=None):
    """sigmoid(x @ weight.T + bias) matching nn.Linear(H, O) + Sigmoid.

    x: [B, H]; weight: [O, H] (PyTorch layout, used as-is, no transpose); b: [O].
    compute_dtype: optional (e.g. jnp.bfloat16).  x is cast cheaply; the weight
    is only cast when it is re-streamed (grid_m > 1) — store it pre-cast for
    the zero-extra-HBM-pass path.  Accumulation and the epilogue stay f32.
    """
    B, H = x.shape
    O, H2 = weight.shape
    assert H == H2, "weight must be [output, hidden]"
    out_dtype = out_dtype or x.dtype

    # ---- Tile selection (respect "divisible by (8,128) or full dim"). ------
    tm = _pick_tile(B, tm, 8)            # balanced last M tile (no 256+44 split)
    tn = _pick_tile(O, tn, 128)          # lane-dense output stores
    if H <= tk:
        tk, mask_k_tail = H, False
    else:
        for cand in (tk, 512, 256):
            if H % cand == 0:
                tk, mask_k_tail = cand, False
                break
        else:
            mask_k_tail = True           # tile anyway; mask K tail in-kernel

    grid_m, grid_n, grid_k = pl.cdiv(B, tm), pl.cdiv(O, tn), pl.cdiv(H, tk)

    # v7x megacore: ensure at least one "parallel" axis has >= 2 tiles so the
    # second TensorCore is not idle (cheap no-op on single-TC v5e/v6e).
    if grid_m == 1 and grid_n == 1:
        if O >= 256:
            tn = _round_up(-(-O // 2), 128)
            grid_n = pl.cdiv(O, tn)
        elif B >= 16:
            tm = _round_up(-(-B // 2), 8)
            grid_m = pl.cdiv(B, tm)

    # ---- Dtype handling (no weight transpose; cast W only if re-streamed). --
    if compute_dtype is not None:
        if weight.dtype != compute_dtype and grid_m > 1:
            weight = weight.astype(compute_dtype)
        if weight.dtype == compute_dtype and x.dtype != compute_dtype:
            x = x.astype(compute_dtype)
    if x.dtype != weight.dtype:          # dot_general needs matching operands
        x = x.astype(weight.dtype)
    bias2d = bias.reshape(1, O).astype(jnp.float32)

    # ---- VMEM budget: double-buffered tiles + accumulator (+ headroom). -----
    x_item = jnp.dtype(x.dtype).itemsize
    w_item = jnp.dtype(weight.dtype).itemsize
    o_item = jnp.dtype(out_dtype).itemsize
    est = (2 * tm * tk * x_item + 2 * tk * tn * w_item
           + 2 * tm * tn * o_item + 2 * tn * 4
           + (tm * tn * 4 if grid_k > 1 else 0))
    vmem_limit = int(min(max(est + est // 2, 32 * 1024 * 1024),
                         64 * 1024 * 1024))          # valid on v7x too

    if grid_k == 1:
        kernel = _decoder_kernel_single_k
        grid_spec = pltpu.PrefetchScalarGridSpec(
            num_scalar_prefetch=0,
            grid=(grid_m, grid_n),
            in_specs=[
                pl.BlockSpec((tm, tk), lambda i, j: (i, 0)),   # x tile
                pl.BlockSpec((tn, tk), lambda i, j: (j, 0)),   # W tile ([O, H])
                pl.BlockSpec((1, tn), lambda i, j: (0, j)),    # bias tile
            ],
            out_specs=pl.BlockSpec((tm, tn), lambda i, j: (i, j)),
        )
        dims = ("parallel", "parallel")
    else:
        kernel = functools.partial(_decoder_kernel_multi_k,
                                   h_total=H, mask_k_tail=mask_k_tail)
        grid_spec = pltpu.PrefetchScalarGridSpec(
            num_scalar_prefetch=0,
            grid=(grid_m, grid_n, grid_k),
            in_specs=[
                pl.BlockSpec((tm, tk), lambda i, j, k: (i, k)),   # x tile
                pl.BlockSpec((tn, tk), lambda i, j, k: (j, k)),   # W tile ([O, H])
                pl.BlockSpec((1, tn), lambda i, j, k: (0, j)),    # bias tile
            ],
            out_specs=pl.BlockSpec((tm, tn), lambda i, j, k: (i, j)),
            scratch_shapes=[pltpu.VMEM((tm, tn), jnp.float32)],
        )
        dims = ("parallel", "parallel", "arbitrary")

    return pl.pallas_call(
        kernel,
        out_shape=jax.ShapeDtypeStruct((B, O), out_dtype),
        grid_spec=grid_spec,
        compiler_params=pltpu.CompilerParams(
            dimension_semantics=dims,
            vmem_limit_bytes=vmem_limit),
    )(x, weight, bias2d)


# --------------------------------------------------------------------------- #
# Self-test
# --------------------------------------------------------------------------- #
if __name__ == "__main__":
    key = jax.random.PRNGKey(0)

    def make_inputs(k, B, H, O):
        kx, kw, kb = jax.random.split(k, 3)
        bound = 1.0 / jnp.sqrt(jnp.float32(H))
        x = jax.random.normal(kx, (B, H), dtype=jnp.float32)
        w = jax.random.uniform(kw, (O, H), minval=-bound, maxval=bound,
                               dtype=jnp.float32)      # nn.Linear stores [O, H]
        b = jax.random.uniform(kb, (O,), minval=-bound, maxval=bound,
                               dtype=jnp.float32)
        return x, w, b

    # --- 1) Spec-sized check (batch=8, hidden=32, output=16), f32. ----------
    x, w, b = make_inputs(key, 8, 32, 16)
    out = jax.block_until_ready(task2_decoder(x, w, b))
    ref = jax.nn.sigmoid(x @ w.T + b)
    assert out.shape == (8, 16)
    assert jnp.allclose(out, ref, atol=1e-4, rtol=1e-4)

    # --- 2) Multi-M streaming + bf16 compute (W re-streamed -> cast pays). --
    x2, w2, b2 = make_inputs(jax.random.PRNGKey(1), 1200, 1024, 384)
    out2 = jax.block_until_ready(
        task2_decoder(x2, w2, b2, compute_dtype=jnp.bfloat16))
    ref2 = jax.nn.sigmoid(x2 @ w2.T + b2)
    assert out2.shape == (1200, 384)
    assert jnp.allclose(out2, ref2, atol=5e-2)

    # --- 3) K tiling with in-kernel tail masking (H=1100 has no 128-divisor),
    #        plus the parallel-axis split path (grid collapses to 1x1). ------
    x3, w3, b3 = make_inputs(jax.random.PRNGKey(2), 64, 1100, 256)
    out3 = jax.block_until_ready(task2_decoder(x3, w3, b3))
    ref3 = jax.nn.sigmoid(x3 @ w3.T + b3)
    assert out3.shape == (64, 256)
    assert jnp.allclose(out3, ref3, atol=1e-2)

    print("KERNEL_OK")
</pallas_src>

<mosaic_0001>
module attributes {stable_mosaic.version = 11 : i64} {
  func.func @_decoder_kernel_single_k(%arg0: i32, %arg1: i32, %arg2: memref<8x32xf32, #tpu.memory_space<vmem>>, %arg3: memref<16x32xf32, #tpu.memory_space<vmem>>, %arg4: memref<1x16xf32, #tpu.memory_space<vmem>>, %arg5: memref<8x16xf32, #tpu.memory_space<vmem>>) attributes {dimension_semantics = [#tpu.dimension_semantics<parallel>, #tpu.dimension_semantics<parallel>], iteration_bounds = array<i64: 1, 1>, scalar_prefetch = 0 : i64, scratch_operands = 0 : i64, tpu.core_type = #tpu.core_type<tc>, window_params = [{transform_indices = @transform_0, window_bounds = array<i64: 8, 32>}, {transform_indices = @transform_1, window_bounds = array<i64: 16, 32>}, {transform_indices = @transform_2, window_bounds = array<i64: 1, 16>}, {transform_indices = @transform_3, window_bounds = array<i64: 8, 16>}]} {
    %c0 = arith.constant 0 : index
    %c0_0 = arith.constant 0 : index
    %0 = vector.load %arg2[%c0, %c0_0] : memref<8x32xf32, #tpu.memory_space<vmem>>, vector<8x32xf32>
    %c0_1 = arith.constant 0 : index
    %c0_2 = arith.constant 0 : index
    %1 = vector.load %arg3[%c0_1, %c0_2] : memref<16x32xf32, #tpu.memory_space<vmem>>, vector<16x32xf32>
    %cst = arith.constant dense<0.000000e+00> : vector<8x16xf32>
    %2 = tpu.matmul %0, %1, %cst {dimension_numbers = #tpu.dot_dimension_numbers<[1], [1], [0], [0], [0, 0, 1, 0], [], []>} : vector<8x32xf32>, vector<16x32xf32>, vector<8x16xf32> -> vector<8x16xf32>
    %c0_3 = arith.constant 0 : index
    %c0_4 = arith.constant 0 : index
    %3 = vector.load %arg4[%c0_3, %c0_4] : memref<1x16xf32, #tpu.memory_space<vmem>>, vector<1x16xf32>
    %4 = vector.broadcast %3 : vector<1x16xf32> to vector<8x16xf32>
    %5 = arith.addf %2, %4 : vector<8x16xf32>
    %6 = arith.negf %5 : vector<8x16xf32>
    %7 = math.exp %6 : vector<8x16xf32>
    %cst_5 = arith.constant 1.000000e+00 : f32
    %8 = vector.broadcast %cst_5 : f32 to vector<8x16xf32>
    %9 = arith.addf %8, %7 : vector<8x16xf32>
    %10 = arith.divf %8, %9 : vector<8x16xf32>
    %c0_6 = arith.constant 0 : index
    %c0_7 = arith.constant 0 : index
    %11 = vector.load %arg5[%c0_6, %c0_7] : memref<8x16xf32, #tpu.memory_space<vmem>>, vector<8x16xf32>
    tpu.vector_store %arg5[%c0_6, %c0_7], %10 {strides = array<i32>} : memref<8x16xf32, #tpu.memory_space<vmem>>, vector<8x16xf32>,
    return
  }
  func.func @transform_0(%arg0: i32, %arg1: i32) -> (i32, i32) {
    %c0_i32 = arith.constant 0 : i32
    %c0_i32_0 = arith.constant 0 : i32
    return %arg0, %c0_i32 : i32, i32
  }
  func.func @transform_1(%arg0: i32, %arg1: i32) -> (i32, i32) {
    %c0_i32 = arith.constant 0 : i32
    %c0_i32_0 = arith.constant 0 : i32
    return %arg1, %c0_i32 : i32, i32
  }
  func.func @transform_2(%arg0: i32, %arg1: i32) -> (i32, i32) {
    %c0_i32 = arith.constant 0 : i32
    %c0_i32_0 = arith.constant 0 : i32
    return %c0_i32, %arg1 : i32, i32
  }
  func.func @transform_3(%arg0: i32, %arg1: i32) -> (i32, i32) {
    %c0_i32 = arith.constant 0 : i32
    return %arg0, %arg1 : i32, i32
  }
}

</mosaic_0001>

<llo_original>
// kernel: tpu_custom_call.1
$region0: #{tpu_custom_call.1}
  #allocation0 [shape = 'u32[]', space=smem, size = 0x4, offset = 0x4, fixed_abs, tag = 'smem constant byte address 0x4 - core index']
  #allocation1 [shape = 'u32[72,128]{1,0:T(1,128)}', space=vmem, size = 0x9000, scoped, tag = 'internal scratch']
  %s0 = inlined_call_operand.hbm [shape: f32[8,32], index: 0, kind: input, shape index: {}]
  %s1 = inlined_call_operand.hbm [shape: f32[16,32], index: 1, kind: input, shape index: {}]
  %s2 = inlined_call_operand.vmem [shape: f32[1,16], index: 2, kind: input, shape index: {}]
  %s3 = inlined_call_operand.hbm [shape: f32[8,16], index: 3, kind: output, shape index: {}]
  %s4 = sld [smem:[#allocation0]]
  $region30: #{tpu_custom_call.1} parent=0
    _
  %s6 = ssub.s32 1, %s4
  %s7 = scalar_select 0, %s6, %s4
  $region1: #{tpu_custom_call.1} parent=0
    #allocation2 [shape = 'u8[4096]{0}', space=vmem, size = 0x1000, scoped, tag = 'input window, operand 0, single buffered']
    #allocation3 [shape = 's32[1]{0}', space=sflag, size = 0x4, scoped, tag = 'scoped memory for tpu_custom_call.1']
    #allocation4 [shape = 's32[1]{0}', space=sflag, size = 0x4, scoped, tag = 'scoped memory for tpu_custom_call.1']
    #allocation5 [shape = 'u8[8192]{0}', space=vmem, size = 0x2000, scoped, tag = 'input window, operand 1, single buffered']
    #allocation6 [shape = 's32[1]{0}', space=sflag, size = 0x4, scoped, tag = 'scoped memory for tpu_custom_call.1']
    #allocation7 [shape = 'u8[4096]{0}', space=vmem, size = 0x1000, scoped, tag = 'output window, operand 0, single buffered']
    %8 = vsyncpa [#allocation3], 0
    %9 = vsyncpa [#allocation6], 0
    %10 = vsyncpa [#allocation4], 0
    // Predicated region
    $region2: #{tpu_custom_call.1} parent=1 // pred_check
      _
    $region3: #{tpu_custom_call.1} parent=1 // pred_check_branch
      %12 = sbr.rel (0) target = $region5
    $region4: #{tpu_custom_call.1} parent=1 // pred_region
      %14 = vsyncadd [#allocation3], 0
      %s16 = sshll.u32 %s0, 4
      %s17 = int_to_ptr.hbm [resolvable:$true] %s16
      %s18 = sshll.u32 [#allocation2], 4
      %s19 = int_to_ptr.vmem [resolvable:$true] %s18
      %21 = dma.hbm_to_vmem [thread:$0]  %s17, 128, %s19, [#allocation3]
    $region5: #{tpu_custom_call.1} parent=1 // pred_fallthru
      _
    // Predicated region
    $region6: #{tpu_custom_call.1} parent=1 // pred_check
      _
    $region7: #{tpu_custom_call.1} parent=1 // pred_check_branch
      %23 = sbr.rel (0) target = $region9
    $region8: #{tpu_custom_call.1} parent=1 // pred_region
      %25 = vsyncadd [#allocation6], 0
      %s26 = sshll.u32 %s1, 4
      %s27 = int_to_ptr.hbm [resolvable:$true] %s26
      %s28 = sshll.u32 [#allocation5], 4
      %s29 = int_to_ptr.vmem [resolvable:$true] %s28
      %34 = dma.hbm_to_vmem [thread:$0]  %s27, 256, %s29, [#allocation6], 128, 128, 8
    $region9: #{tpu_custom_call.1} parent=1 // pred_fallthru
      _
    // Predicated region
    $region10: #{tpu_custom_call.1} parent=1 // pred_check
      _
    $region11: #{tpu_custom_call.1} parent=1 // pred_check_branch
      %36 = sbr.rel (0) target = $region13
    $region12: #{tpu_custom_call.1} parent=1 // pred_region
      _
    $region13: #{tpu_custom_call.1} parent=1 // pred_fallthru
      _
    // Predicated region
    $region14: #{tpu_custom_call.1} parent=1 // pred_check
      _
    $region15: #{tpu_custom_call.1} parent=1 // pred_check_branch
      %38 = sbr.rel (0) target = $region17
    $region16: #{tpu_custom_call.1} parent=1 // pred_region
      %40 = dma.done [#allocation3], 128
    $region17: #{tpu_custom_call.1} parent=1 // pred_fallthru
      _
    // Predicated region
    $region18: #{tpu_custom_call.1} parent=1 // pred_check
      _
    $region19: #{tpu_custom_call.1} parent=1 // pred_check_branch
      %42 = sbr.rel (0) target = $region21
    $region20: #{tpu_custom_call.1} parent=1 // pred_region
      %44 = dma.done [#allocation6], 256
    $region21: #{tpu_custom_call.1} parent=1 // pred_fallthru
      _
    %v45 = vld [vmem:[#allocation2] sm:$0xff]
    %v46 = vld [vmem:[#allocation5] sm:$0xff]
    %v47 = vld [vmem:[#allocation5 + $0x8] sm:$0xff]
    %v48 = vld [vmem:[%s2] sm:$0x1]
    %v50 = vperm.slane %v48, 0
    %vm52 = vcmask 261120
    %v54 = vsel %vm52, %v45, 0
    %v57 = vsel %vm52, %v46, 0
    %v60 = vsel %vm52, %v47, 0
    %62 = vmatpush.xpose.msra.mxu0 0.0
    %63 = vmatpush.xpose.msra.mxu0 0.0
    %64 = vmatpush.xpose.msra.mxu0 0.0
    %65 = vmatpush.xpose.msra.mxu0 0.0
    %66 = vmatpush.xpose.msra.mxu0 0.0
    %67 = vmatpush.xpose.msra.mxu0 0.0
    %68 = vmatpush.xpose.msra.mxu0 0.0
    %69 = vmatpush.xpose.msra.mxu0 0.0
    %70 = vmatpush.xpose.msra.mxu0 0.0
    %71 = vmatpush.xpose.msra.mxu0 0.0
    %72 = vmatpush.xpose.msra.mxu0 0.0
    %73 = vmatpush.xpose.msra.mxu0 0.0
    %74 = vmatpush.xpose.msra.mxu0 0.0
    %75 = vmatpush.xpose.msra.mxu0 0.0
    %76 = vmatpush.xpose.msra.mxu0 %v60
    %77 = vmatpush.xpose.msra.mxu0 %v57
    %78 = vmatmul.f32.gmra.mxu0 %v54
    %v79 = vpop.f32.mrf.mxu0
    %v80 = vadd.f32 %v50, %v79
    %81 = vdwg.mxu0
    %v82 = vxor.u32 %v80, 2147483648
    %v83 = vmul.f32 %v82, 1.442695
    %v84 = vpow.pop %v83
    %v85 = vadd.f32 %v84, 1.0
    %v86 = vrcp.pop %v85
    %v87 = vmul.f32 %v85, %v86
    %v88 = vsub.f32 1.0, %v87
    %v89 = vmul.f32 %v86, %v88
    %v90 = vadd.f32 %v86, %v89
    %vm91 = vweird.f32 %v85
    %vm92 = vweird.f32 %v86
    %vm93 = vmor %vm91, %vm92
    %v94 = vsel %vm93, %v86, %v90
    %v95 = vand.u32 2147483647, %v85
    %vm96 = vcmp.eq.f32.partialorder %v95, 8.507059e+37
    %v97 = vand.u32 %v85, 2147483648
    %v98 = vor.u32 1.1754944e-38, %v97
    %v99 = vsel %vm96, %v98, %v94
    %v100 = vmul.f32 1.0, %v99
    %vm101 = vcmask 130048
    %102 = vst.msk [vmem:[#allocation7] sm:$0xff] %vm101, %v100
    // Predicated region
    $region22: #{tpu_custom_call.1} parent=1 // pred_check
      _
    $region23: #{tpu_custom_call.1} parent=1 // pred_check_branch
      %104 = sbr.rel (0) target = $region25
    $region24: #{tpu_custom_call.1} parent=1 // pred_region
      %106 = vsyncadd [#allocation4], 0
      %s108 = sshll.u32 [#allocation7], 4
      %s109 = int_to_ptr.vmem [resolvable:$true] %s108
      %s110 = sshll.u32 %s3, 4
      %s111 = int_to_ptr.hbm [resolvable:$true] %s110
      %113 = dma.vmem_to_hbm [thread:$0]  %s109, 128, %s111, [#allocation4]
    $region25: #{tpu_custom_call.1} parent=1 // pred_fallthru
      _
    // Predicated region
    $region26: #{tpu_custom_call.1} parent=1 // pred_check
      _
    $region27: #{tpu_custom_call.1} parent=1 // pred_check_branch
      %115 = sbr.rel (0) target = $region29
    $region28: #{tpu_custom_call.1} parent=1 // pred_region
      %117 = dma.done [#allocation4], 128
    $region29: #{tpu_custom_call.1} parent=1 // pred_fallthru
      _
    %118 = vsyncpa [#allocation3], 1
    %119 = vsyncpa [#allocation6], 1
    %120 = vsyncpa [#allocation4], 1

</llo_original>
